<compile_context>
chip_gen: v5e
topology: v5e:2x2
jax: 0.10.0
libtpu: 0.0.40
codegen_flags: <defaults>
</compile_context>

<pallas_src>
import math
import numpy as np
import jax
import jax.numpy as jnp
from jax.experimental import pallas as pl
from jax.experimental.pallas import tpu as pltpu


def build_pe_table(d_model: int, max_len: int) -> jnp.ndarray:
    """Deterministic sin/cos table, shape (max_len, d_model), float32."""
    position = np.arange(0, max_len, dtype=np.float32)[:, None]           # (L, 1)
    div_term = np.exp(np.arange(0, d_model, 2, dtype=np.float32)
                      * (-math.log(10000.0) / d_model))                   # (D/2,)
    pe = np.zeros((max_len, d_model), dtype=np.float32)
    pe[:, 0::2] = np.sin(position * div_term)
    pe[:, 1::2] = np.cos(position * div_term)
    return jnp.asarray(pe)


def _pe_add_kernel(x_ref, pe_ref, o_ref):
    # x_ref : VMEM block (TILE_R, D')
    # pe_ref: VMEM block (1, D')  -- resident PE row (already lane-folded)
    # o_ref : VMEM block (TILE_R, D')
    o_ref[...] = x_ref[...] + pe_ref[...]          # broadcast over rows


def _pick_tile_rows(rows: int, row_bytes: int,
                    target_block_bytes: int = 2 * 1024 * 1024) -> int:
    """Largest multiple-of-8 divisor of `rows` whose block is ~target bytes."""
    if rows % 8 != 0:
        return rows                                # full-extent block (always legal)
    cap = max(8, (target_block_bytes // max(row_bytes, 1)) // 8 * 8)
    tile = min(rows, cap)
    while rows % tile != 0:
        tile -= 8
    return tile


def positional_encoding_add(x: jnp.ndarray, iteration, pe_table: jnp.ndarray,
                            target_block_bytes: int = 2 * 1024 * 1024) -> jnp.ndarray:
    orig_shape = x.shape
    D = orig_shape[-1]
    max_len, d_model = pe_table.shape
    assert d_model == D

    # --- wrapper-side row select (tiny): clamp + slice + cast to x.dtype -----
    it = jnp.clip(jnp.asarray(iteration, jnp.int32), 0, max_len - 1)
    pe_row = jax.lax.dynamic_slice_in_dim(pe_table, it, 1, axis=0)         # (1, D)
    pe_row = pe_row.astype(x.dtype)

    # --- flatten leading dims; fold rows into lanes if D is not lane-dense ---
    rows = int(np.prod(orig_shape[:-1])) if len(orig_shape) > 1 else 1
    x2 = x.reshape(rows, D)

    fold = 1
    if D % 128 != 0:
        k = 128 // math.gcd(D, 128)                # smallest k with (D*k) % 128 == 0
        if k > 1 and rows % k == 0:
            fold = k
    R2, D2 = rows // fold, D * fold
    x2 = x2.reshape(R2, D2)
    pe2 = jnp.tile(pe_row, (1, fold)) if fold > 1 else pe_row              # (1, D2)

    # --- tile the row axis into large, sublane-aligned blocks ----------------
    itemsize = jnp.dtype(x.dtype).itemsize
    tile_r = _pick_tile_rows(R2, D2 * itemsize, target_block_bytes)
    grid = (R2 // tile_r,)

    grid_spec = pltpu.PrefetchScalarGridSpec(
        num_scalar_prefetch=0,
        grid=grid,
        in_specs=[
            pl.BlockSpec((tile_r, D2), lambda r: (r, 0)),   # x tile (streamed)
            pl.BlockSpec((1, D2), lambda r: (0, 0)),        # PE row (resident)
        ],
        out_specs=pl.BlockSpec((tile_r, D2), lambda r: (r, 0)),
    )

    out2 = pl.pallas_call(
        _pe_add_kernel,
        out_shape=jax.ShapeDtypeStruct((R2, D2), x.dtype),
        grid_spec=grid_spec,
        compiler_params=pltpu.CompilerParams(
            dimension_semantics=("parallel",),
            vmem_limit_bytes=32 * 1024 * 1024,
        ),
    )(x2, pe2)

    return out2.reshape(orig_shape)


if __name__ == "__main__":
    key = jax.random.PRNGKey(0)
    k1, k2 = jax.random.split(key)

    # Case 1: toy shapes matching the module (D < 128 exercises lane folding).
    B, S, D = 2, 8, 32
    MAX_LEN, ITERATION = 16, 5
    x = jax.random.normal(k1, (B, S, D), dtype=jnp.float32)
    pe_table = build_pe_table(D, MAX_LEN)
    out = jax.block_until_ready(positional_encoding_add(x, ITERATION, pe_table))
    ref = x + pe_table[ITERATION]
    assert out.shape == x.shape and out.dtype == x.dtype
    assert jnp.allclose(out, ref, atol=1e-6, rtol=1e-6)

    # Case 2: lane-dense D (multiple of 128) with a multi-tile row grid
    # (small target_block_bytes only to exercise the tiled path at small size).
    B2, S2, D2 = 2, 128, 128
    MAX2, IT2 = 256, 100
    x_b = jax.random.normal(k2, (B2, S2, D2), dtype=jnp.float32)
    pe_b = build_pe_table(D2, MAX2)
    out_b = jax.block_until_ready(
        positional_encoding_add(x_b, IT2, pe_b, target_block_bytes=32 * 1024))
    ref_b = x_b + pe_b[IT2]
    assert out_b.shape == x_b.shape and out_b.dtype == x_b.dtype
    assert jnp.allclose(out_b, ref_b, atol=1e-6, rtol=1e-6)

    print("KERNEL_OK")
</pallas_src>

<mosaic_0001>
module attributes {stable_mosaic.version = 11 : i64} {
  func.func @_pe_add_kernel(%arg0: i32, %arg1: memref<4x128xf32, #tpu.memory_space<vmem>>, %arg2: memref<1x128xf32, #tpu.memory_space<vmem>>, %arg3: memref<4x128xf32, #tpu.memory_space<vmem>>) attributes {dimension_semantics = [#tpu.dimension_semantics<parallel>], iteration_bounds = array<i64: 1>, scalar_prefetch = 0 : i64, scratch_operands = 0 : i64, tpu.core_type = #tpu.core_type<tc>, window_params = [{transform_indices = @transform_0, window_bounds = array<i64: 4, 128>}, {pipeline_mode = #tpu.pipeline_mode<synchronous>, transform_indices = @transform_1, window_bounds = array<i64: 1, 128>}, {transform_indices = @transform_2, window_bounds = array<i64: 4, 128>}]} {
    %c0 = arith.constant 0 : index
    %c0_0 = arith.constant 0 : index
    %0 = vector.load %arg1[%c0, %c0_0] : memref<4x128xf32, #tpu.memory_space<vmem>>, vector<4x128xf32>
    %c0_1 = arith.constant 0 : index
    %c0_2 = arith.constant 0 : index
    %1 = vector.load %arg2[%c0_1, %c0_2] : memref<1x128xf32, #tpu.memory_space<vmem>>, vector<1x128xf32>
    %2 = vector.broadcast %1 : vector<1x128xf32> to vector<4x128xf32>
    %3 = arith.addf %0, %2 : vector<4x128xf32>
    %c0_3 = arith.constant 0 : index
    %c0_4 = arith.constant 0 : index
    %4 = vector.load %arg3[%c0_3, %c0_4] : memref<4x128xf32, #tpu.memory_space<vmem>>, vector<4x128xf32>
    tpu.vector_store %arg3[%c0_3, %c0_4], %3 {strides = array<i32>} : memref<4x128xf32, #tpu.memory_space<vmem>>, vector<4x128xf32>,
    return
  }
  func.func @transform_0(%arg0: i32) -> (i32, i32) {
    %c0_i32 = arith.constant 0 : i32
    %c0_i32_0 = arith.constant 0 : i32
    return %arg0, %c0_i32 : i32, i32
  }
  func.func @transform_1(%arg0: i32) -> (i32, i32) {
    %c0_i32 = arith.constant 0 : i32
    %c0_i32_0 = arith.constant 0 : i32
    %c0_i32_1 = arith.constant 0 : i32
    return %c0_i32, %c0_i32_0 : i32, i32
  }
  func.func @transform_2(%arg0: i32) -> (i32, i32) {
    %c0_i32 = arith.constant 0 : i32
    %c0_i32_0 = arith.constant 0 : i32
    return %arg0, %c0_i32 : i32, i32
  }
}

</mosaic_0001>

<llo_original>
// kernel: tpu_custom_call.1
$region0: #{tpu_custom_call.1}
  #allocation0 [shape = 'u32[]', space=smem, size = 0x4, offset = 0x4, fixed_abs, tag = 'smem constant byte address 0x4 - core index']
  #allocation1 [shape = 'u32[72,128]{1,0:T(1,128)}', space=vmem, size = 0x9000, scoped, tag = 'internal scratch']
  %s0 = inlined_call_operand.hbm [shape: f32[4,128], index: 0, kind: input, shape index: {}]
  %s1 = inlined_call_operand.hbm [shape: f32[1,128], index: 1, kind: input, shape index: {}]
  %s2 = inlined_call_operand.hbm [shape: f32[4,128], index: 2, kind: output, shape index: {}]
  %s3 = sld [smem:[#allocation0]]
  $region26: #{tpu_custom_call.1} parent=0
    _
  %s5 = ssub.s32 1, %s3
  %s6 = scalar_select 0, %s5, %s3
  $region1: #{tpu_custom_call.1} parent=0
    #allocation2 [shape = 'u8[2048]{0}', space=vmem, size = 0x800, scoped, tag = 'input window, operand 0, single buffered']
    #allocation3 [shape = 's32[1]{0}', space=sflag, size = 0x4, scoped, tag = 'scoped memory for tpu_custom_call.1']
    #allocation4 [shape = 's32[1]{0}', space=sflag, size = 0x4, scoped, tag = 'scoped memory for tpu_custom_call.1']
    #allocation5 [shape = 'u8[512]{0}', space=vmem, size = 0x400, scoped, tag = 'input window, operand 1, single buffered']
    #allocation6 [shape = 's32[1]{0}', space=sflag, size = 0x4, scoped, tag = 'scoped memory for tpu_custom_call.1']
    #allocation7 [shape = 'u8[2048]{0}', space=vmem, size = 0x800, scoped, tag = 'output window, operand 0, single buffered']
    %7 = vsyncpa [#allocation3], 0
    %8 = vsyncpa [#allocation6], 0
    %9 = vsyncpa [#allocation4], 0
    // Predicated region
    $region2: #{tpu_custom_call.1} parent=1 // pred_check
      _
    $region3: #{tpu_custom_call.1} parent=1 // pred_check_branch
      %11 = sbr.rel (0) target = $region5
    $region4: #{tpu_custom_call.1} parent=1 // pred_region
      %13 = vsyncadd [#allocation3], 0
      %s15 = sshll.u32 %s0, 4
      %s16 = int_to_ptr.hbm [resolvable:$true] %s15
      %s17 = sshll.u32 [#allocation2], 4
      %s18 = int_to_ptr.vmem [resolvable:$true] %s17
      %20 = dma.hbm_to_vmem [thread:$0]  %s16, 64, %s18, [#allocation3]
    $region5: #{tpu_custom_call.1} parent=1 // pred_fallthru
      _
    // Predicated region
    $region6: #{tpu_custom_call.1} parent=1 // pred_check
      _
    $region7: #{tpu_custom_call.1} parent=1 // pred_check_branch
      %22 = sbr.rel (0) target = $region9
    $region8: #{tpu_custom_call.1} parent=1 // pred_region
      %24 = vsyncadd [#allocation6], 0
      %s26 = sshll.u32 %s1, 4
      %s27 = int_to_ptr.hbm [resolvable:$true] %s26
      %s28 = sshll.u32 [#allocation5], 4
      %s29 = int_to_ptr.vmem [resolvable:$true] %s28
      %31 = dma.hbm_to_vmem [thread:$0]  %s27, 16, %s29, [#allocation6]
    $region9: #{tpu_custom_call.1} parent=1 // pred_fallthru
      _
    // Predicated region
    $region10: #{tpu_custom_call.1} parent=1 // pred_check
      _
    $region11: #{tpu_custom_call.1} parent=1 // pred_check_branch
      %33 = sbr.rel (0) target = $region13
    $region12: #{tpu_custom_call.1} parent=1 // pred_region
      %35 = dma.done [#allocation3], 64
    $region13: #{tpu_custom_call.1} parent=1 // pred_fallthru
      _
    // Predicated region
    $region14: #{tpu_custom_call.1} parent=1 // pred_check
      _
    $region15: #{tpu_custom_call.1} parent=1 // pred_check_branch
      %37 = sbr.rel (0) target = $region17
    $region16: #{tpu_custom_call.1} parent=1 // pred_region
      %39 = dma.done [#allocation6], 16
    $region17: #{tpu_custom_call.1} parent=1 // pred_fallthru
      _
    %v40 = vld [vmem:[#allocation2] sm:$0xf]
    %v41 = vld [vmem:[#allocation5] sm:$0x1]
    %v43 = vperm.slane %v41, 0
    %v45 = vadd.f32 %v40, %v43
    %46 = vst [vmem:[#allocation7] sm:$0xf] %v45
    // Predicated region
    $region18: #{tpu_custom_call.1} parent=1 // pred_check
      _
    $region19: #{tpu_custom_call.1} parent=1 // pred_check_branch
      %48 = sbr.rel (0) target = $region21
    $region20: #{tpu_custom_call.1} parent=1 // pred_region
      %50 = vsyncadd [#allocation4], 0
      %s52 = sshll.u32 [#allocation7], 4
      %s53 = int_to_ptr.vmem [resolvable:$true] %s52
      %s54 = sshll.u32 %s2, 4
      %s55 = int_to_ptr.hbm [resolvable:$true] %s54
      %57 = dma.vmem_to_hbm [thread:$0]  %s53, 64, %s55, [#allocation4]
    $region21: #{tpu_custom_call.1} parent=1 // pred_fallthru
      _
    // Predicated region
    $region22: #{tpu_custom_call.1} parent=1 // pred_check
      _
    $region23: #{tpu_custom_call.1} parent=1 // pred_check_branch
      %59 = sbr.rel (0) target = $region25
    $region24: #{tpu_custom_call.1} parent=1 // pred_region
      %61 = dma.done [#allocation4], 64
    $region25: #{tpu_custom_call.1} parent=1 // pred_fallthru
      _
    %62 = vsyncpa [#allocation3], 1
    %63 = vsyncpa [#allocation6], 1
    %64 = vsyncpa [#allocation4], 1

</llo_original>
